<compile_context>
chip_gen: v5e
topology: v5e:2x2
jax: 0.10.0
libtpu: 0.0.40
codegen_flags: <defaults>
</compile_context>

<pallas_src>
import functools

import numpy as np
import jax
import jax.numpy as jnp
from jax.experimental import pallas as pl
from jax.experimental.pallas import tpu as pltpu

LEVEL = 3
NNODES = 2 ** LEVEL          # 8 frequency nodes at level 3
LANE = 128                   # TPU lane width: pack 16 blocks of 8 per row


# ----------------------------------------------------------------------------
# Haar packet matrix (pywt 'freq' node ordering)
# ----------------------------------------------------------------------------
def _graycode_order(level):
    # identical to pywt.WaveletPacket's 'freq' ordering
    order = ['a', 'd']
    for _ in range(level - 1):
        order = ['a' + p for p in order] + ['d' + p for p in reversed(order)]
    return order


def _freq_perm(level):
    # freq position -> natural (lexicographic a<d) node index
    return np.array([int(p.replace('a', '0').replace('d', '1'), 2)
                     for p in _graycode_order(level)], dtype=np.int32)


def haar_packet_matrix(level):
    """(2^level, 2^level) matrix W with node_j[k] = x[n*k:n*k+n] @ W[:, j],
    columns in pywt 'freq' order."""
    n = 2 ** level
    s = 1.0 / np.sqrt(2.0)
    nodes = [np.eye(n, dtype=np.float64)]
    for _ in range(level):
        nxt = []
        for a in nodes:
            nxt.append((a[:, 0::2] + a[:, 1::2]) * s)
            nxt.append((a[:, 0::2] - a[:, 1::2]) * s)
        nodes = nxt                        # natural (lexicographic) order
    w_nat = np.concatenate(nodes, axis=1)  # (n, n)
    return w_nat[:, _freq_perm(level)]


def blockdiag_packet_matrix(level, lane=LANE):
    """kron(I_{lane//n}, W): 128x128 block-diagonal weight so a lane-dense
    (TM, 128) row of 16 consecutive 8-sample blocks maps to 16 consecutive
    8-coefficient blocks -- identical to (N, 8) @ W."""
    w8 = haar_packet_matrix(level)
    n = w8.shape[0]
    assert lane % n == 0
    wbd = np.kron(np.eye(lane // n, dtype=np.float64), w8)
    return jnp.asarray(wbd, dtype=jnp.float32)


# ----------------------------------------------------------------------------
# Kernel
# ----------------------------------------------------------------------------
def wpt_kernel(x_ref, w_ref, o_ref):
    # (TM, 128) @ (128, 128) -> (TM, 128): full-width MXU matmul,
    # lane-dense loads and unmasked stores (except the masked ragged tail).
    o_ref[...] = jnp.dot(x_ref[...], w_ref[...],
                         preferred_element_type=jnp.float32)


# ----------------------------------------------------------------------------
# Per-generation defaults
# ----------------------------------------------------------------------------
_DEFAULTS_CACHE = None


def _tpu_defaults():
    """Returns (tm, min_grid_steps) tuned per TPU generation."""
    global _DEFAULTS_CACHE
    if _DEFAULTS_CACHE is None:
        try:
            kind = jax.devices()[0].device_kind.lower()
        except Exception:  # pragma: no cover - defensive fallback
            kind = ""
        if "v7" in kind:
            # 2 TensorCores + ~3.2 TB/s HBM: bigger tiles, keep >=4 grid steps
            # so the "parallel" axis actually shards across both cores.
            _DEFAULTS_CACHE = (8192, 4)
        else:
            # v5e/v6e (1 TC): 4096-row tiles make the ~0.35us step overhead
            # negligible while staying well inside scoped VMEM.
            _DEFAULTS_CACHE = (4096, 1)
    return _DEFAULTS_CACHE


def _align8(v):
    return max(8, ((int(v) + 7) // 8) * 8)


# ----------------------------------------------------------------------------
# Wrapper
# ----------------------------------------------------------------------------
@functools.partial(jax.jit, static_argnums=(1, 2, 3))
def _wpt_packed(x, level, tm, min_grid_steps):
    C, L = x.shape
    n = 2 ** level
    seg = L // n
    total = C * L                               # total samples == total coeffs

    xf = x.reshape(-1).astype(jnp.float32)

    # Only the sub-128-element tail (total % 128 != 0) needs zero padding;
    # everything else is handled by the cdiv grid + masked ragged last block.
    pad = (-total) % LANE                       # <= 120 elements (total % 8 == 0)
    if pad:
        xf = jnp.pad(xf, (0, pad))
    rows = (total + pad) // LANE
    xb = xf.reshape(rows, LANE)                 # byte-identical to (C*seg, 8)

    # Tile height: large for streaming, 8-aligned, clamped for tiny inputs and
    # (on v7x) so the grid keeps >= min_grid_steps steps for both TensorCores.
    tm_eff = min(tm, _align8(rows), _align8(pl.cdiv(rows, min_grid_steps)))
    grid = pl.cdiv(rows, tm_eff)

    W = blockdiag_packet_matrix(level)

    # Explicit scoped-VMEM budget: 2 double-buffered (tm,128) f32 tiles
    # (in + out) + the resident 128x128 weight, plus slack.
    vmem_bytes = (4 * tm_eff * LANE + 2 * LANE * LANE) * 4 + (2 << 20)
    cost = pl.CostEstimate(
        flops=2 * rows * LANE * LANE,
        bytes_accessed=(2 * rows * LANE + LANE * LANE) * 4,
        transcendentals=0,
    )

    out = pl.pallas_call(
        wpt_kernel,
        out_shape=jax.ShapeDtypeStruct((rows, LANE), jnp.float32),
        grid_spec=pl.GridSpec(
            grid=(grid,),
            in_specs=[
                pl.BlockSpec((tm_eff, LANE), lambda i: (i, 0)),
                # constant index_map -> weight stays resident, no re-DMA
                pl.BlockSpec((LANE, LANE), lambda i: (0, 0)),
            ],
            out_specs=pl.BlockSpec((tm_eff, LANE), lambda i: (i, 0)),
        ),
        compiler_params=pltpu.CompilerParams(
            dimension_semantics=("parallel",),      # shards across v7x's 2 TCs
            vmem_limit_bytes=int(vmem_bytes),
        ),
        cost_estimate=cost,
    )(xb, W)

    out = out.reshape(-1)
    if pad:
        out = out[:total]
    return out.reshape(C, seg, n)


def wavelet_packet_transform(x, level=LEVEL, tm=None, min_grid_steps=None):
    """x: (C, L) float32 with L % 2^level == 0.

    Returns packed coefficients of shape (C, L // 2^level, 2^level):
    out[c, k, j] == sample k of pywt freq-ordered node j of channel c.
    Use `to_coeff_list` for the PyTorch module's nested-list output.
    """
    C, L = x.shape
    n = 2 ** level
    assert L % n == 0, "signal length must be divisible by 2^level"
    d_tm, d_steps = _tpu_defaults()
    tm = int(tm) if tm else d_tm
    min_grid_steps = int(min_grid_steps) if min_grid_steps else d_steps
    return _wpt_packed(x, level, tm, min_grid_steps)


def to_coeff_list(packed):
    """Module-semantics glue: list (per channel) of lists (per freq node) of
    1-D length-seg arrays, same nesting as the PyTorch forward."""
    C, seg, n = packed.shape
    return [[packed[c, :, j] for j in range(n)] for c in range(C)]


def ref_wpt_packed(x, level=LEVEL):
    """Pure-JAX reference (recursive Haar analysis + freq reorder), returned
    in the same packed (C, seg, 2^level) layout."""
    s = 1.0 / np.sqrt(2.0)
    nodes = [x.astype(jnp.float32)]
    for _ in range(level):
        nxt = []
        for a in nodes:
            nxt.append((a[:, 0::2] + a[:, 1::2]) * s)
            nxt.append((a[:, 0::2] - a[:, 1::2]) * s)
        nodes = nxt
    perm = _freq_perm(level)
    stacked = jnp.stack([nodes[int(i)] for i in perm], axis=1)  # (C, 8, seg)
    return stacked.transpose(0, 2, 1)                           # (C, seg, 8)


if __name__ == "__main__":
    # Small deterministic test, shapes consistent with the module's (C, L) input.
    key = jax.random.PRNGKey(0)
    C, L = 4, 64
    x = jax.random.normal(key, (C, L), dtype=jnp.float32)

    packed = jax.block_until_ready(wavelet_packet_transform(x))
    ref = ref_wpt_packed(x)
    np.testing.assert_allclose(np.asarray(packed), np.asarray(ref),
                               rtol=1e-5, atol=1e-5)

    # Module-semantics nesting: list (channel) of lists (freq node) of 1-D arrays.
    coeffs_list = to_coeff_list(packed)
    assert len(coeffs_list) == C and len(coeffs_list[0]) == NNODES
    assert coeffs_list[0][0].shape == (L // NNODES,)
    np.testing.assert_allclose(np.asarray(coeffs_list[1][3]),
                               np.asarray(ref[1, :, 3]), rtol=1e-5, atol=1e-5)

    # Ragged-tail path: total % 128 != 0 and rows not a multiple of 8.
    C2, L2 = 3, 5000
    x2 = jax.random.normal(jax.random.PRNGKey(1), (C2, L2), dtype=jnp.float32)
    packed2 = jax.block_until_ready(wavelet_packet_transform(x2))
    ref2 = ref_wpt_packed(x2)
    np.testing.assert_allclose(np.asarray(packed2), np.asarray(ref2),
                               rtol=1e-5, atol=1e-5)

    # Multi-step grid + masked ragged last block (forced small tile).
    packed3 = jax.block_until_ready(
        wavelet_packet_transform(x2, tm=32, min_grid_steps=1))
    np.testing.assert_allclose(np.asarray(packed3), np.asarray(ref2),
                               rtol=1e-5, atol=1e-5)

    print("KERNEL_OK")
</pallas_src>

<mosaic_0001>
module attributes {stable_mosaic.version = 11 : i64} {
  func.func @wpt_kernel(%arg0: i32, %arg1: memref<8x128xf32, #tpu.memory_space<vmem>>, %arg2: memref<128x128xf32, #tpu.memory_space<vmem>>, %arg3: memref<8x128xf32, #tpu.memory_space<vmem>>) attributes {dimension_semantics = [#tpu.dimension_semantics<parallel>], iteration_bounds = array<i64: 1>, scalar_prefetch = 0 : i64, scratch_operands = 0 : i64, tpu.core_type = #tpu.core_type<tc>, window_params = [{transform_indices = @transform_0, window_bounds = array<i64: 8, 128>}, {pipeline_mode = #tpu.pipeline_mode<synchronous>, transform_indices = @transform_1, window_bounds = array<i64: 128, 128>}, {transform_indices = @transform_2, window_bounds = array<i64: 8, 128>}]} {
    %c0 = arith.constant 0 : index
    %c0_0 = arith.constant 0 : index
    %0 = vector.load %arg1[%c0, %c0_0] : memref<8x128xf32, #tpu.memory_space<vmem>>, vector<8x128xf32>
    %c0_1 = arith.constant 0 : index
    %c0_2 = arith.constant 0 : index
    %1 = vector.load %arg2[%c0_1, %c0_2] : memref<128x128xf32, #tpu.memory_space<vmem>>, vector<128x128xf32>
    %cst = arith.constant dense<0.000000e+00> : vector<8x128xf32>
    %2 = tpu.matmul %0, %1, %cst {dimension_numbers = #tpu.dot_dimension_numbers<[1], [0], [0], [1], [0, 0, 1, 1], [], []>} : vector<8x128xf32>, vector<128x128xf32>, vector<8x128xf32> -> vector<8x128xf32>
    %c0_3 = arith.constant 0 : index
    %c0_4 = arith.constant 0 : index
    %3 = vector.load %arg3[%c0_3, %c0_4] : memref<8x128xf32, #tpu.memory_space<vmem>>, vector<8x128xf32>
    tpu.vector_store %arg3[%c0_3, %c0_4], %2 {strides = array<i32>} : memref<8x128xf32, #tpu.memory_space<vmem>>, vector<8x128xf32>,
    return
  }
  func.func @transform_0(%arg0: i32) -> (i32, i32) {
    %c0_i32 = arith.constant 0 : i32
    %c0_i32_0 = arith.constant 0 : i32
    return %arg0, %c0_i32 : i32, i32
  }
  func.func @transform_1(%arg0: i32) -> (i32, i32) {
    %c0_i32 = arith.constant 0 : i32
    %c0_i32_0 = arith.constant 0 : i32
    %c0_i32_1 = arith.constant 0 : i32
    return %c0_i32, %c0_i32_0 : i32, i32
  }
  func.func @transform_2(%arg0: i32) -> (i32, i32) {
    %c0_i32 = arith.constant 0 : i32
    %c0_i32_0 = arith.constant 0 : i32
    return %arg0, %c0_i32 : i32, i32
  }
}

</mosaic_0001>

<llo_original>
// kernel: _wpt_packed.1
$region0: #{_wpt_packed.1}
  #allocation0 [shape = 'u32[]', space=smem, size = 0x4, offset = 0x4, fixed_abs, tag = 'smem constant byte address 0x4 - core index']
  #allocation1 [shape = 'u32[72,128]{1,0:T(1,128)}', space=vmem, size = 0x9000, scoped, tag = 'internal scratch']
  %s0 = inlined_call_operand.vmem [shape: f32[2,128], index: 0, kind: input, shape index: {}]
  %s1 = inlined_call_operand.hbm [shape: f32[128,128], index: 1, kind: input, shape index: {}]
  %s2 = inlined_call_operand.vmem [shape: f32[2,128], index: 2, kind: output, shape index: {}]
  %s3 = sld [smem:[#allocation0]]
  $region52: #{_wpt_packed.1} parent=0
    _
  %s5 = ssub.s32 1, %s3
  %s6 = scalar_select 0, %s5, %s3
  $region1: #{_wpt_packed.1} parent=0
    #allocation2 [shape = 'u8[65536]{0}', space=vmem, size = 0x10000, scoped, tag = 'input window, operand 1, single buffered']
    #allocation3 [shape = 's32[1]{0}', space=sflag, size = 0x4, scoped, tag = 'scoped memory for _wpt_packed.1']
    #allocation4 [shape = 'u8[4096]{0}', space=vmem, size = 0x1000, scoped, tag = 'output window, operand 0, single buffered']
    %7 = vsyncpa [#allocation3], 0
    // Predicated region
    $region2: #{_wpt_packed.1} parent=1 // pred_check
      _
    $region3: #{_wpt_packed.1} parent=1 // pred_check_branch
      %9 = sbr.rel (0) target = $region5
    $region4: #{_wpt_packed.1} parent=1 // pred_region
      _
    $region5: #{_wpt_packed.1} parent=1 // pred_fallthru
      _
    // Predicated region
    $region6: #{_wpt_packed.1} parent=1 // pred_check
      _
    $region7: #{_wpt_packed.1} parent=1 // pred_check_branch
      %11 = sbr.rel (0) target = $region9
    $region8: #{_wpt_packed.1} parent=1 // pred_region
      %13 = vsyncadd [#allocation3], 0
      %s14 = sshll.u32 %s1, 4
      %s15 = int_to_ptr.hbm [resolvable:$true] %s14
      %s16 = sshll.u32 [#allocation2], 4
      %s17 = int_to_ptr.vmem [resolvable:$true] %s16
      %22 = dma.hbm_to_vmem [thread:$0]  %s15, 2048, %s17, [#allocation3], 128, 128, 8
    $region9: #{_wpt_packed.1} parent=1 // pred_fallthru
      _
    // Predicated region
    $region10: #{_wpt_packed.1} parent=1 // pred_check
      _
    $region11: #{_wpt_packed.1} parent=1 // pred_check_branch
      %24 = sbr.rel (0) target = $region13
    $region12: #{_wpt_packed.1} parent=1 // pred_region
      %26 = dma.done [#allocation3], 2048
    $region13: #{_wpt_packed.1} parent=1 // pred_fallthru
      _
    %v27 = vld [vmem:[%s0] sm:$0xff]
    %v28 = vld [vmem:[#allocation2] sm:$0xff]
    %v29 = vld [vmem:[#allocation2 + $0x8] sm:$0xff]
    %v30 = vld [vmem:[#allocation2 + $0x10] sm:$0xff]
    %v31 = vld [vmem:[#allocation2 + $0x18] sm:$0xff]
    %v32 = vld [vmem:[#allocation2 + $0x20] sm:$0xff]
    %v33 = vld [vmem:[#allocation2 + $0x28] sm:$0xff]
    %v34 = vld [vmem:[#allocation2 + $0x30] sm:$0xff]
    %v35 = vld [vmem:[#allocation2 + $0x38] sm:$0xff]
    %v36 = vld [vmem:[#allocation2 + $0x40] sm:$0xff]
    %v37 = vld [vmem:[#allocation2 + $0x48] sm:$0xff]
    %v38 = vld [vmem:[#allocation2 + $0x50] sm:$0xff]
    %v39 = vld [vmem:[#allocation2 + $0x58] sm:$0xff]
    %v40 = vld [vmem:[#allocation2 + $0x60] sm:$0xff]
    %v41 = vld [vmem:[#allocation2 + $0x68] sm:$0xff]
    %v42 = vld [vmem:[#allocation2 + $0x70] sm:$0xff]
    %v43 = vld [vmem:[#allocation2 + $0x78] sm:$0xff]
    %44 = vmatpush.msra.mxu0 %v43
    %45 = vmatpush.msra.mxu0 %v42
    %46 = vmatpush.msra.mxu0 %v41
    %47 = vmatpush.msra.mxu0 %v40
    %48 = vmatpush.msra.mxu0 %v39
    %49 = vmatpush.msra.mxu0 %v38
    %50 = vmatpush.msra.mxu0 %v37
    %51 = vmatpush.msra.mxu0 %v36
    %52 = vmatpush.msra.mxu0 %v35
    %53 = vmatpush.msra.mxu0 %v34
    %54 = vmatpush.msra.mxu0 %v33
    %55 = vmatpush.msra.mxu0 %v32
    %56 = vmatpush.msra.mxu0 %v31
    %57 = vmatpush.msra.mxu0 %v30
    %58 = vmatpush.msra.mxu0 %v29
    %59 = vmatpush.msra.mxu0 %v28
    %60 = vmatmul.f32.gmra.mxu0 %v27
    %v61 = vpop.f32.mrf.mxu0
    %v62 = vadd.f32 0.0, %v61
    %63 = vdwg.mxu0
    %64 = vst [vmem:[#allocation4] sm:$0xff] %v62
    // Predicated region
    $region14: #{_wpt_packed.1} parent=1 // pred_check
      _
    $region15: #{_wpt_packed.1} parent=1 // pred_check_branch
      %66 = sbr.rel (0) target = $region17
    $region16: #{_wpt_packed.1} parent=1 // pred_region
      // Predicated region
      $region18: #{_wpt_packed.1} parent=16 // pred_check
        _
      $region19: #{_wpt_packed.1} parent=16 // pred_check_branch
        %68 = sbr.rel (0) target = $region21
      $region20: #{_wpt_packed.1} parent=16 // pred_region
        // Predicated region
        $region22: #{_wpt_packed.1} parent=20 // pred_check
          _
        $region23: #{_wpt_packed.1} parent=20 // pred_check_branch
          %70 = sbr.rel target = $region25
        $region24: #{_wpt_packed.1} parent=20 // pred_region
          // Predicated region
          $region37: #{_wpt_packed.1} parent=24 // pred_check
            _
          $region38: #{_wpt_packed.1} parent=24 // pred_check_branch
            %86 = sbr.rel (0) target = $region40
          $region39: #{_wpt_packed.1} parent=24 // pred_region
            %s88 = ssub.s32 4, 1
            loop: start=0, step=1, limit=1
            $region41: #{_wpt_packed.1} parent=39 // loop_pre_header
              _
            $region42: #{_wpt_packed.1} parent=39 // loop_header
              %s90 = sphi 0, %s94
              %p91 = scmp.ge.s32.totalorder %s90, 1
              %s95 = sphi [#allocation4], [#allocation4]
              %s96 = sphi %s2, %s2
            $region43: #{_wpt_packed.1} parent=39 // loop_header_branch
              %93 = sbr.rel (%p91) target = $region47
            $region44: #{_wpt_packed.1} parent=39 // loop_body
              %v97 = vld [vmem:[%s95] sm:%s88]
              %98 = vst [vmem:[%s96] sm:%s88] %v97
            $region45: #{_wpt_packed.1} parent=39 // loop_footer
              %s94 = sadd.s32 1, %s90
            $region46: #{_wpt_packed.1} parent=39 // loop_footer_branch
              %89 = sbr.rel target = $region42
            $region47: #{_wpt_packed.1} parent=39 // loop_exit
              _
          $region40: #{_wpt_packed.1} parent=24 // pred_fallthru
            _
        $region25: #{_wpt_packed.1} parent=20 // pred_fallthru
          _
        // Predicated region
        $region26: #{_wpt_packed.1} parent=20 // pred_check
          _
        $region27: #{_wpt_packed.1} parent=20 // pred_check_branch
          %72 = sbr.rel (0) target = $region29
        $region28: #{_wpt_packed.1} parent=20 // pred_region
          %s74 = ssub.s32 4, 1
          loop: start=0, step=1, limit=1
          $region30: #{_wpt_packed.1} parent=28 // loop_pre_header
            _
          $region31: #{_wpt_packed.1} parent=28 // loop_header
            %s76 = sphi 0, %s80
            %p77 = scmp.ge.s32.totalorder %s76, 1
            %s81 = sphi [#allocation4], [#allocation4]
            %s82 = sphi %s2, %s2
          $region32: #{_wpt_packed.1} parent=28 // loop_header_branch
            %79 = sbr.rel (%p77) target = $region36
          $region33: #{_wpt_packed.1} parent=28 // loop_body
            %v83 = vld [vmem:[%s81] sm:%s74]
            %84 = vst [vmem:[%s82] sm:%s74] %v83
          $region34: #{_wpt_packed.1} parent=28 // loop_footer
            %s80 = sadd.s32 1, %s76
          $region35: #{_wpt_packed.1} parent=28 // loop_footer_branch
            %75 = sbr.rel target = $region31
          $region36: #{_wpt_packed.1} parent=28 // loop_exit
            _
        $region29: #{_wpt_packed.1} parent=20 // pred_fallthru
          _
      $region21: #{_wpt_packed.1} parent=16 // pred_fallthru
        _
      %99 = vnop
    $region17: #{_wpt_packed.1} parent=1 // pred_fallthru
      _
    // Predicated region
    $region48: #{_wpt_packed.1} parent=1 // pred_check
      _
    $region49: #{_wpt_packed.1} parent=1 // pred_check_branch
      %101 = sbr.rel (0) target = $region51
    $region50: #{_wpt_packed.1} parent=1 // pred_region
      _
    $region51: #{_wpt_packed.1} parent=1 // pred_fallthru
      _
    %102 = vsyncpa [#allocation3], 1

</llo_original>
